<compile_context>
chip_gen: v5e
topology: v5e:2x2
jax: 0.10.0
libtpu: 0.0.40
codegen_flags: <defaults>
</compile_context>

<pallas_src>
import jax
import jax.numpy as jnp
from jax.experimental import pallas as pl
from jax.experimental.pallas import tpu as pltpu

BN_EPS = 1e-5


def _ensemble_kernel(x_ref, w0_ref, b0_ref, g_ref, be_ref,
                     w1_ref, b1_ref, w2_ref, b2_ref,
                     means_ref, mean_ref):
    M, H, _ = w1_ref.shape
    Out = w2_ref.shape[-1]
    B = x_ref.shape[0]

    x = x_ref[...]                                                   # (B, In)

    # layer_0 for all models at once: (B, In) @ (In, M*H) -- lane-dense.
    h = jnp.dot(x, w0_ref[...], preferred_element_type=jnp.float32) + b0_ref[...]

    # BatchNorm1d, training mode (biased variance), two-pass form for stability.
    # Column-wise batch stats on the concatenated slab == per-model BN per chunk.
    mu = jnp.mean(h, axis=0, keepdims=True)
    d = h - mu
    var = jnp.mean(d * d, axis=0, keepdims=True)
    h = d * jax.lax.rsqrt(var + BN_EPS) * g_ref[...] + be_ref[...]
    h = jnp.maximum(h, 0.0)                                          # relu

    # Per-model layer_1 / layer_2, statically unrolled (M is tiny).
    # h[:, m*H:(m+1)*H] is a 128-aligned static lane slice -> zero cost.
    acc = jnp.zeros((B, Out), jnp.float32)
    for m in range(M):
        hm = h[:, m * H:(m + 1) * H]                                 # (B, H)
        hm = jnp.dot(hm, w1_ref[m], preferred_element_type=jnp.float32) \
            + b1_ref[:, m * H:(m + 1) * H]
        hm = jnp.maximum(hm, 0.0)                                    # relu
        om = jnp.dot(hm, w2_ref[m], preferred_element_type=jnp.float32) \
            + b2_ref[m]                                              # (B, Out)
        means_ref[m] = om
        acc = acc + om

    mean_ref[...] = acc * (1.0 / M)                                  # ensemble mean


def prepare_params(params):
    """One-time packing of stacked per-model params (call only when params change)."""
    w0, b0, g, be = params["w0"], params["b0"], params["gamma"], params["beta"]
    w1, b1, w2, b2 = params["w1"], params["b1"], params["w2"], params["b2"]
    M, In, H = w0.shape
    Out = w2.shape[-1]
    return dict(
        w0_cat=jnp.transpose(w0, (1, 0, 2)).reshape(In, M * H),     # (In, M*H)
        b0_cat=b0.reshape(1, M * H),
        g_cat=g.reshape(1, M * H),
        be_cat=be.reshape(1, M * H),
        w1=w1,                                                      # (M, H, H)
        b1_cat=b1.reshape(1, M * H),
        w2=w2,                                                      # (M, H, Out)
        b2=b2.reshape(M, 1, Out),
    )


@jax.jit
def ensemble_forward(x, packed):
    """x: (B, In) float32. packed: output of prepare_params.
    Returns (mean, means): mean (B, Out) ensemble average, means (M, B, Out)."""
    M, H, Out = packed["w2"].shape
    B = x.shape[0]

    vmem = pl.BlockSpec(memory_space=pltpu.MemorySpace.VMEM)

    means, mean = pl.pallas_call(
        _ensemble_kernel,
        out_shape=(jax.ShapeDtypeStruct((M, B, Out), jnp.float32),
                   jax.ShapeDtypeStruct((B, Out), jnp.float32)),
        in_specs=[vmem] * 9,
        out_specs=(vmem, vmem),
    )(x, packed["w0_cat"], packed["b0_cat"], packed["g_cat"], packed["be_cat"],
      packed["w1"], packed["b1_cat"], packed["w2"], packed["b2"])

    return mean, means


def init_params(key, num_models, input_dim, output_dim, hidden=128):
    """Deterministic synthetic init mimicking nn.Linear default U(-1/sqrt(fan_in), .)."""
    ks = jax.random.split(key, 8)

    def lin(k, m, fan_in, fan_out):
        bound = 1.0 / jnp.sqrt(fan_in)
        kw, kb = jax.random.split(k)
        w = jax.random.uniform(kw, (m, fan_in, fan_out), jnp.float32, -bound, bound)
        b = jax.random.uniform(kb, (m, fan_out), jnp.float32, -bound, bound)
        return w, b

    w0, b0 = lin(ks[0], num_models, input_dim, hidden)
    w1, b1 = lin(ks[1], num_models, hidden, hidden)
    w2, b2 = lin(ks[2], num_models, hidden, output_dim)
    gamma = jnp.ones((num_models, hidden), jnp.float32)   # BatchNorm1d weight init = 1
    beta = jnp.zeros((num_models, hidden), jnp.float32)   # BatchNorm1d bias init = 0
    return dict(w0=w0, b0=b0, gamma=gamma, beta=beta,
                w1=w1, b1=b1, w2=w2, b2=b2)


def reference_forward(x, params):
    """Pure-JAX reference of the ensemble of GaussianMLP.forward passes."""
    def one(w0, b0, g, be, w1, b1, w2, b2):
        h = x @ w0 + b0
        mu = jnp.mean(h, axis=0, keepdims=True)
        var = jnp.mean((h - mu) ** 2, axis=0, keepdims=True)
        h = jnp.maximum((h - mu) * jax.lax.rsqrt(var + BN_EPS) * g + be, 0.0)
        h = jnp.maximum(h @ w1 + b1, 0.0)
        return h @ w2 + b2
    means = jax.vmap(one)(params["w0"], params["b0"], params["gamma"], params["beta"],
                          params["w1"], params["b1"], params["w2"], params["b2"])
    return jnp.mean(means, axis=0), means


if __name__ == "__main__":
    key = jax.random.PRNGKey(0)
    k_param, k_x = jax.random.split(key)

    num_models = 5
    input_dim = 6       # (state, action) feature dim
    output_dim = 4      # next-state dim
    batch = 8

    params = init_params(k_param, num_models, input_dim, output_dim, hidden=128)
    packed = prepare_params(params)          # one-time packing, out of the hot path
    x = jax.random.normal(k_x, (batch, input_dim), jnp.float32)

    mean, means = ensemble_forward(x, packed)
    jax.block_until_ready((mean, means))

    ref_mean, ref_means = reference_forward(x, params)
    assert jnp.allclose(mean, ref_mean, atol=1e-4, rtol=1e-4)
    assert jnp.allclose(means, ref_means, atol=1e-4, rtol=1e-4)

    print("KERNEL_OK")
</pallas_src>

<mosaic_0001>
module attributes {stable_mosaic.version = 11 : i64} {
  func.func @_ensemble_kernel(%arg0: memref<8x6xf32, #tpu.memory_space<vmem>>, %arg1: memref<6x640xf32, #tpu.memory_space<vmem>>, %arg2: memref<1x640xf32, #tpu.memory_space<vmem>>, %arg3: memref<1x640xf32, #tpu.memory_space<vmem>>, %arg4: memref<1x640xf32, #tpu.memory_space<vmem>>, %arg5: memref<5x128x128xf32, #tpu.memory_space<vmem>>, %arg6: memref<1x640xf32, #tpu.memory_space<vmem>>, %arg7: memref<5x128x4xf32, #tpu.memory_space<vmem>>, %arg8: memref<5x1x4xf32, #tpu.memory_space<vmem>>, %arg9: memref<5x8x4xf32, #tpu.memory_space<vmem>>, %arg10: memref<8x4xf32, #tpu.memory_space<vmem>>) attributes {dimension_semantics = [], scalar_prefetch = 0 : i64, scratch_operands = 0 : i64, tpu.core_type = #tpu.core_type<tc>} {
    %c0 = arith.constant 0 : index
    %c0_0 = arith.constant 0 : index
    %0 = vector.load %arg0[%c0, %c0_0] : memref<8x6xf32, #tpu.memory_space<vmem>>, vector<8x6xf32>
    %c0_1 = arith.constant 0 : index
    %c0_2 = arith.constant 0 : index
    %1 = vector.load %arg1[%c0_1, %c0_2] : memref<6x640xf32, #tpu.memory_space<vmem>>, vector<6x640xf32>
    %cst = arith.constant dense<0.000000e+00> : vector<8x640xf32>
    %2 = tpu.matmul %0, %1, %cst {dimension_numbers = #tpu.dot_dimension_numbers<[1], [0], [0], [1], [0, 0, 1, 1], [], []>} : vector<8x6xf32>, vector<6x640xf32>, vector<8x640xf32> -> vector<8x640xf32>
    %c0_3 = arith.constant 0 : index
    %c0_4 = arith.constant 0 : index
    %3 = vector.load %arg2[%c0_3, %c0_4] : memref<1x640xf32, #tpu.memory_space<vmem>>, vector<1x640xf32>
    %4 = vector.broadcast %3 : vector<1x640xf32> to vector<8x640xf32>
    %5 = arith.addf %2, %4 : vector<8x640xf32>
    %cst_5 = arith.constant dense<0.000000e+00> : vector<640xf32>
    %6 = vector.multi_reduction <add>, %5, %cst_5 [0] : vector<8x640xf32> to vector<640xf32>
    %7 = vector.shape_cast %6 : vector<640xf32> to vector<1x640xf32>
    %cst_6 = arith.constant 8.000000e+00 : f32
    %8 = vector.broadcast %cst_6 : f32 to vector<1x640xf32>
    %9 = arith.divf %7, %8 : vector<1x640xf32>
    %10 = vector.broadcast %9 : vector<1x640xf32> to vector<8x640xf32>
    %11 = arith.subf %5, %10 : vector<8x640xf32>
    %12 = arith.mulf %11, %11 : vector<8x640xf32>
    %cst_7 = arith.constant dense<0.000000e+00> : vector<640xf32>
    %13 = vector.multi_reduction <add>, %12, %cst_7 [0] : vector<8x640xf32> to vector<640xf32>
    %14 = vector.shape_cast %13 : vector<640xf32> to vector<1x640xf32>
    %cst_8 = arith.constant 8.000000e+00 : f32
    %15 = vector.broadcast %cst_8 : f32 to vector<1x640xf32>
    %16 = arith.divf %14, %15 : vector<1x640xf32>
    %cst_9 = arith.constant 9.99999974E-6 : f32
    %17 = vector.broadcast %cst_9 : f32 to vector<1x640xf32>
    %18 = arith.addf %16, %17 : vector<1x640xf32>
    %19 = math.rsqrt %18 : vector<1x640xf32>
    %20 = vector.broadcast %19 : vector<1x640xf32> to vector<8x640xf32>
    %21 = arith.mulf %11, %20 : vector<8x640xf32>
    %c0_10 = arith.constant 0 : index
    %c0_11 = arith.constant 0 : index
    %22 = vector.load %arg3[%c0_10, %c0_11] : memref<1x640xf32, #tpu.memory_space<vmem>>, vector<1x640xf32>
    %23 = vector.broadcast %22 : vector<1x640xf32> to vector<8x640xf32>
    %24 = arith.mulf %21, %23 : vector<8x640xf32>
    %c0_12 = arith.constant 0 : index
    %c0_13 = arith.constant 0 : index
    %25 = vector.load %arg4[%c0_12, %c0_13] : memref<1x640xf32, #tpu.memory_space<vmem>>, vector<1x640xf32>
    %26 = vector.broadcast %25 : vector<1x640xf32> to vector<8x640xf32>
    %27 = arith.addf %24, %26 : vector<8x640xf32>
    %cst_14 = arith.constant 0.000000e+00 : f32
    %28 = vector.broadcast %cst_14 : f32 to vector<8x640xf32>
    %29 = arith.maximumf %27, %28 : vector<8x640xf32>
    %cst_15 = arith.constant 0.000000e+00 : f32
    %30 = vector.broadcast %cst_15 : f32 to vector<8x4xf32>
    %31 = vector.extract_strided_slice %29 {offsets = [0, 0], sizes = [8, 128], strides = [1, 1]} : vector<8x640xf32> to vector<8x128xf32>
    %c0_16 = arith.constant 0 : index
    %c0_17 = arith.constant 0 : index
    %c0_18 = arith.constant 0 : index
    %32 = vector.load %arg5[%c0_16, %c0_17, %c0_18] : memref<5x128x128xf32, #tpu.memory_space<vmem>>, vector<1x128x128xf32>
    %33 = vector.shape_cast %32 : vector<1x128x128xf32> to vector<128x128xf32>
    %cst_19 = arith.constant dense<0.000000e+00> : vector<8x128xf32>
    %34 = tpu.matmul %31, %33, %cst_19 {dimension_numbers = #tpu.dot_dimension_numbers<[1], [0], [0], [1], [0, 0, 1, 1], [], []>} : vector<8x128xf32>, vector<128x128xf32>, vector<8x128xf32> -> vector<8x128xf32>
    %c0_20 = arith.constant 0 : index
    %c0_21 = arith.constant 0 : index
    %35 = vector.load %arg6[%c0_20, %c0_21] : memref<1x640xf32, #tpu.memory_space<vmem>>, vector<1x128xf32>
    %36 = vector.broadcast %35 : vector<1x128xf32> to vector<8x128xf32>
    %37 = arith.addf %34, %36 : vector<8x128xf32>
    %cst_22 = arith.constant 0.000000e+00 : f32
    %38 = vector.broadcast %cst_22 : f32 to vector<8x128xf32>
    %39 = arith.maximumf %37, %38 : vector<8x128xf32>
    %c0_23 = arith.constant 0 : index
    %c0_24 = arith.constant 0 : index
    %c0_25 = arith.constant 0 : index
    %40 = vector.load %arg7[%c0_23, %c0_24, %c0_25] : memref<5x128x4xf32, #tpu.memory_space<vmem>>, vector<1x128x4xf32>
    %41 = vector.shape_cast %40 : vector<1x128x4xf32> to vector<128x4xf32>
    %cst_26 = arith.constant dense<0.000000e+00> : vector<8x4xf32>
    %42 = tpu.matmul %39, %41, %cst_26 {dimension_numbers = #tpu.dot_dimension_numbers<[1], [0], [0], [1], [0, 0, 1, 1], [], []>} : vector<8x128xf32>, vector<128x4xf32>, vector<8x4xf32> -> vector<8x4xf32>
    %c0_27 = arith.constant 0 : index
    %c0_28 = arith.constant 0 : index
    %c0_29 = arith.constant 0 : index
    %43 = vector.load %arg8[%c0_27, %c0_28, %c0_29] : memref<5x1x4xf32, #tpu.memory_space<vmem>>, vector<1x1x4xf32>
    %44 = vector.shape_cast %43 : vector<1x1x4xf32> to vector<1x4xf32>
    %45 = vector.broadcast %44 : vector<1x4xf32> to vector<8x4xf32>
    %46 = arith.addf %42, %45 : vector<8x4xf32>
    %c0_30 = arith.constant 0 : index
    %c0_31 = arith.constant 0 : index
    %c0_32 = arith.constant 0 : index
    %47 = vector.load %arg9[%c0_30, %c0_31, %c0_32] : memref<5x8x4xf32, #tpu.memory_space<vmem>>, vector<1x8x4xf32>
    %48 = vector.shape_cast %47 : vector<1x8x4xf32> to vector<8x4xf32>
    %49 = vector.shape_cast %46 : vector<8x4xf32> to vector<1x8x4xf32>
    tpu.vector_store %arg9[%c0_30, %c0_31, %c0_32], %49 {strides = array<i32>} : memref<5x8x4xf32, #tpu.memory_space<vmem>>, vector<1x8x4xf32>,
    %50 = arith.addf %30, %46 : vector<8x4xf32>
    %51 = vector.extract_strided_slice %29 {offsets = [0, 128], sizes = [8, 128], strides = [1, 1]} : vector<8x640xf32> to vector<8x128xf32>
    %c1 = arith.constant 1 : index
    %c0_33 = arith.constant 0 : index
    %c0_34 = arith.constant 0 : index
    %52 = vector.load %arg5[%c1, %c0_33, %c0_34] : memref<5x128x128xf32, #tpu.memory_space<vmem>>, vector<1x128x128xf32>
    %53 = vector.shape_cast %52 : vector<1x128x128xf32> to vector<128x128xf32>
    %cst_35 = arith.constant dense<0.000000e+00> : vector<8x128xf32>
    %54 = tpu.matmul %51, %53, %cst_35 {dimension_numbers = #tpu.dot_dimension_numbers<[1], [0], [0], [1], [0, 0, 1, 1], [], []>} : vector<8x128xf32>, vector<128x128xf32>, vector<8x128xf32> -> vector<8x128xf32>
    %c0_36 = arith.constant 0 : index
    %c128 = arith.constant 128 : index
    %55 = vector.load %arg6[%c0_36, %c128] : memref<1x640xf32, #tpu.memory_space<vmem>>, vector<1x128xf32>
    %56 = vector.broadcast %55 : vector<1x128xf32> to vector<8x128xf32>
    %57 = arith.addf %54, %56 : vector<8x128xf32>
    %cst_37 = arith.constant 0.000000e+00 : f32
    %58 = vector.broadcast %cst_37 : f32 to vector<8x128xf32>
    %59 = arith.maximumf %57, %58 : vector<8x128xf32>
    %c1_38 = arith.constant 1 : index
    %c0_39 = arith.constant 0 : index
    %c0_40 = arith.constant 0 : index
    %60 = vector.load %arg7[%c1_38, %c0_39, %c0_40] : memref<5x128x4xf32, #tpu.memory_space<vmem>>, vector<1x128x4xf32>
    %61 = vector.shape_cast %60 : vector<1x128x4xf32> to vector<128x4xf32>
    %cst_41 = arith.constant dense<0.000000e+00> : vector<8x4xf32>
    %62 = tpu.matmul %59, %61, %cst_41 {dimension_numbers = #tpu.dot_dimension_numbers<[1], [0], [0], [1], [0, 0, 1, 1], [], []>} : vector<8x128xf32>, vector<128x4xf32>, vector<8x4xf32> -> vector<8x4xf32>
    %c1_42 = arith.constant 1 : index
    %c0_43 = arith.constant 0 : index
    %c0_44 = arith.constant 0 : index
    %63 = vector.load %arg8[%c1_42, %c0_43, %c0_44] : memref<5x1x4xf32, #tpu.memory_space<vmem>>, vector<1x1x4xf32>
    %64 = vector.shape_cast %63 : vector<1x1x4xf32> to vector<1x4xf32>
    %65 = vector.broadcast %64 : vector<1x4xf32> to vector<8x4xf32>
    %66 = arith.addf %62, %65 : vector<8x4xf32>
    %c1_45 = arith.constant 1 : index
    %c0_46 = arith.constant 0 : index
    %c0_47 = arith.constant 0 : index
    %67 = vector.load %arg9[%c1_45, %c0_46, %c0_47] : memref<5x8x4xf32, #tpu.memory_space<vmem>>, vector<1x8x4xf32>
    %68 = vector.shape_cast %67 : vector<1x8x4xf32> to vector<8x4xf32>
    %69 = vector.shape_cast %66 : vector<8x4xf32> to vector<1x8x4xf32>
    tpu.vector_store %arg9[%c1_45, %c0_46, %c0_47], %69 {strides = array<i32>} : memref<5x8x4xf32, #tpu.memory_space<vmem>>, vector<1x8x4xf32>,
    %70 = arith.addf %50, %66 : vector<8x4xf32>
    %71 = vector.extract_strided_slice %29 {offsets = [0, 256], sizes = [8, 128], strides = [1, 1]} : vector<8x640xf32> to vector<8x128xf32>
    %c2 = arith.constant 2 : index
    %c0_48 = arith.constant 0 : index
    %c0_49 = arith.constant 0 : index
    %72 = vector.load %arg5[%c2, %c0_48, %c0_49] : memref<5x128x128xf32, #tpu.memory_space<vmem>>, vector<1x128x128xf32>
    %73 = vector.shape_cast %72 : vector<1x128x128xf32> to vector<128x128xf32>
    %cst_50 = arith.constant dense<0.000000e+00> : vector<8x128xf32>
    %74 = tpu.matmul %71, %73, %cst_50 {dimension_numbers = #tpu.dot_dimension_numbers<[1], [0], [0], [1], [0, 0, 1, 1], [], []>} : vector<8x128xf32>, vector<128x128xf32>, vector<8x128xf32> -> vector<8x128xf32>
    %c0_51 = arith.constant 0 : index
    %c256 = arith.constant 256 : index
    %75 = vector.load %arg6[%c0_51, %c256] : memref<1x640xf32, #tpu.memory_space<vmem>>, vector<1x128xf32>
    %76 = vector.broadcast %75 : vector<1x128xf32> to vector<8x128xf32>
    %77 = arith.addf %74, %76 : vector<8x128xf32>
    %cst_52 = arith.constant 0.000000e+00 : f32
    %78 = vector.broadcast %cst_52 : f32 to vector<8x128xf32>
    %79 = arith.maximumf %77, %78 : vector<8x128xf32>
    %c2_53 = arith.constant 2 : index
    %c0_54 = arith.constant 0 : index
    %c0_55 = arith.constant 0 : index
    %80 = vector.load %arg7[%c2_53, %c0_54, %c0_55] : memref<5x128x4xf32, #tpu.memory_space<vmem>>, vector<1x128x4xf32>
    %81 = vector.shape_cast %80 : vector<1x128x4xf32> to vector<128x4xf32>
    %cst_56 = arith.constant dense<0.000000e+00> : vector<8x4xf32>
    %82 = tpu.matmul %79, %81, %cst_56 {dimension_numbers = #tpu.dot_dimension_numbers<[1], [0], [0], [1], [0, 0, 1, 1], [], []>} : vector<8x128xf32>, vector<128x4xf32>, vector<8x4xf32> -> vector<8x4xf32>
    %c2_57 = arith.constant 2 : index
    %c0_58 = arith.constant 0 : index
    %c0_59 = arith.constant 0 : index
    %83 = vector.load %arg8[%c2_57, %c0_58, %c0_59] : memref<5x1x4xf32, #tpu.memory_space<vmem>>, vector<1x1x4xf32>
    %84 = vector.shape_cast %83 : vector<1x1x4xf32> to vector<1x4xf32>
    %85 = vector.broadcast %84 : vector<1x4xf32> to vector<8x4xf32>
    %86 = arith.addf %82, %85 : vector<8x4xf32>
    %c2_60 = arith.constant 2 : index
    %c0_61 = arith.constant 0 : index
    %c0_62 = arith.constant 0 : index
    %87 = vector.load %arg9[%c2_60, %c0_61, %c0_62] : memref<5x8x4xf32, #tpu.memory_space<vmem>>, vector<1x8x4xf32>
    %88 = vector.shape_cast %87 : vector<1x8x4xf32> to vector<8x4xf32>
    %89 = vector.shape_cast %86 : vector<8x4xf32> to vector<1x8x4xf32>
    tpu.vector_store %arg9[%c2_60, %c0_61, %c0_62], %89 {strides = array<i32>} : memref<5x8x4xf32, #tpu.memory_space<vmem>>, vector<1x8x4xf32>,
    %90 = arith.addf %70, %86 : vector<8x4xf32>
    %91 = vector.extract_strided_slice %29 {offsets = [0, 384], sizes = [8, 128], strides = [1, 1]} : vector<8x640xf32> to vector<8x128xf32>
    %c3 = arith.constant 3 : index
    %c0_63 = arith.constant 0 : index
    %c0_64 = arith.constant 0 : index
    %92 = vector.load %arg5[%c3, %c0_63, %c0_64] : memref<5x128x128xf32, #tpu.memory_space<vmem>>, vector<1x128x128xf32>
    %93 = vector.shape_cast %92 : vector<1x128x128xf32> to vector<128x128xf32>
    %cst_65 = arith.constant dense<0.000000e+00> : vector<8x128xf32>
    %94 = tpu.matmul %91, %93, %cst_65 {dimension_numbers = #tpu.dot_dimension_numbers<[1], [0], [0], [1], [0, 0, 1, 1], [], []>} : vector<8x128xf32>, vector<128x128xf32>, vector<8x128xf32> -> vector<8x128xf32>
    %c0_66 = arith.constant 0 : index
    %c384 = arith.constant 384 : index
    %95 = vector.load %arg6[%c0_66, %c384] : memref<1x640xf32, #tpu.memory_space<vmem>>, vector<1x128xf32>
    %96 = vector.broadcast %95 : vector<1x128xf32> to vector<8x128xf32>
    %97 = arith.addf %94, %96 : vector<8x128xf32>
    %cst_67 = arith.constant 0.000000e+00 : f32
    %98 = vector.broadcast %cst_67 : f32 to vector<8x128xf32>
    %99 = arith.maximumf %97, %98 : vector<8x128xf32>
    %c3_68 = arith.constant 3 : index
    %c0_69 = arith.constant 0 : index
    %c0_70 = arith.constant 0 : index
    %100 = vector.load %arg7[%c3_68, %c0_69, %c0_70] : memref<5x128x4xf32, #tpu.memory_space<vmem>>, vector<1x128x4xf32>
    %101 = vector.shape_cast %100 : vector<1x128x4xf32> to vector<128x4xf32>
    %cst_71 = arith.constant dense<0.000000e+00> : vector<8x4xf32>
    %102 = tpu.matmul %99, %101, %cst_71 {dimension_numbers = #tpu.dot_dimension_numbers<[1], [0], [0], [1], [0, 0, 1, 1], [], []>} : vector<8x128xf32>, vector<128x4xf32>, vector<8x4xf32> -> vector<8x4xf32>
    %c3_72 = arith.constant 3 : index
    %c0_73 = arith.constant 0 : index
    %c0_74 = arith.constant 0 : index
    %103 = vector.load %arg8[%c3_72, %c0_73, %c0_74] : memref<5x1x4xf32, #tpu.memory_space<vmem>>, vector<1x1x4xf32>
    %104 = vector.shape_cast %103 : vector<1x1x4xf32> to vector<1x4xf32>
    %105 = vector.broadcast %104 : vector<1x4xf32> to vector<8x4xf32>
    %106 = arith.addf %102, %105 : vector<8x4xf32>
    %c3_75 = arith.constant 3 : index
    %c0_76 = arith.constant 0 : index
    %c0_77 = arith.constant 0 : index
    %107 = vector.load %arg9[%c3_75, %c0_76, %c0_77] : memref<5x8x4xf32, #tpu.memory_space<vmem>>, vector<1x8x4xf32>
    %108 = vector.shape_cast %107 : vector<1x8x4xf32> to vector<8x4xf32>
    %109 = vector.shape_cast %106 : vector<8x4xf32> to vector<1x8x4xf32>
    tpu.vector_store %arg9[%c3_75, %c0_76, %c0_77], %109 {strides = array<i32>} : memref<5x8x4xf32, #tpu.memory_space<vmem>>, vector<1x8x4xf32>,
    %110 = arith.addf %90, %106 : vector<8x4xf32>
    %111 = vector.extract_strided_slice %29 {offsets = [0, 512], sizes = [8, 128], strides = [1, 1]} : vector<8x640xf32> to vector<8x128xf32>
    %c4 = arith.constant 4 : index
    %c0_78 = arith.constant 0 : index
    %c0_79 = arith.constant 0 : index
    %112 = vector.load %arg5[%c4, %c0_78, %c0_79] : memref<5x128x128xf32, #tpu.memory_space<vmem>>, vector<1x128x128xf32>
    %113 = vector.shape_cast %112 : vector<1x128x128xf32> to vector<128x128xf32>
    %cst_80 = arith.constant dense<0.000000e+00> : vector<8x128xf32>
    %114 = tpu.matmul %111, %113, %cst_80 {dimension_numbers = #tpu.dot_dimension_numbers<[1], [0], [0], [1], [0, 0, 1, 1], [], []>} : vector<8x128xf32>, vector<128x128xf32>, vector<8x128xf32> -> vector<8x128xf32>
    %c0_81 = arith.constant 0 : index
    %c512 = arith.constant 512 : index
    %115 = vector.load %arg6[%c0_81, %c512] : memref<1x640xf32, #tpu.memory_space<vmem>>, vector<1x128xf32>
    %116 = vector.broadcast %115 : vector<1x128xf32> to vector<8x128xf32>
    %117 = arith.addf %114, %116 : vector<8x128xf32>
    %cst_82 = arith.constant 0.000000e+00 : f32
    %118 = vector.broadcast %cst_82 : f32 to vector<8x128xf32>
    %119 = arith.maximumf %117, %118 : vector<8x128xf32>
    %c4_83 = arith.constant 4 : index
    %c0_84 = arith.constant 0 : index
    %c0_85 = arith.constant 0 : index
    %120 = vector.load %arg7[%c4_83, %c0_84, %c0_85] : memref<5x128x4xf32, #tpu.memory_space<vmem>>, vector<1x128x4xf32>
    %121 = vector.shape_cast %120 : vector<1x128x4xf32> to vector<128x4xf32>
    %cst_86 = arith.constant dense<0.000000e+00> : vector<8x4xf32>
    %122 = tpu.matmul %119, %121, %cst_86 {dimension_numbers = #tpu.dot_dimension_numbers<[1], [0], [0], [1], [0, 0, 1, 1], [], []>} : vector<8x128xf32>, vector<128x4xf32>, vector<8x4xf32> -> vector<8x4xf32>
    %c4_87 = arith.constant 4 : index
    %c0_88 = arith.constant 0 : index
    %c0_89 = arith.constant 0 : index
    %123 = vector.load %arg8[%c4_87, %c0_88, %c0_89] : memref<5x1x4xf32, #tpu.memory_space<vmem>>, vector<1x1x4xf32>
    %124 = vector.shape_cast %123 : vector<1x1x4xf32> to vector<1x4xf32>
    %125 = vector.broadcast %124 : vector<1x4xf32> to vector<8x4xf32>
    %126 = arith.addf %122, %125 : vector<8x4xf32>
    %c4_90 = arith.constant 4 : index
    %c0_91 = arith.constant 0 : index
    %c0_92 = arith.constant 0 : index
    %127 = vector.load %arg9[%c4_90, %c0_91, %c0_92] : memref<5x8x4xf32, #tpu.memory_space<vmem>>, vector<1x8x4xf32>
    %128 = vector.shape_cast %127 : vector<1x8x4xf32> to vector<8x4xf32>
    %129 = vector.shape_cast %126 : vector<8x4xf32> to vector<1x8x4xf32>
    tpu.vector_store %arg9[%c4_90, %c0_91, %c0_92], %129 {strides = array<i32>} : memref<5x8x4xf32, #tpu.memory_space<vmem>>, vector<1x8x4xf32>,
    %130 = arith.addf %110, %126 : vector<8x4xf32>
    %cst_93 = arith.constant 2.000000e-01 : f32
    %131 = vector.broadcast %cst_93 : f32 to vector<8x4xf32>
    %132 = arith.mulf %130, %131 : vector<8x4xf32>
    %c0_94 = arith.constant 0 : index
    %c0_95 = arith.constant 0 : index
    %133 = vector.load %arg10[%c0_94, %c0_95] : memref<8x4xf32, #tpu.memory_space<vmem>>, vector<8x4xf32>
    tpu.vector_store %arg10[%c0_94, %c0_95], %132 {strides = array<i32>} : memref<8x4xf32, #tpu.memory_space<vmem>>, vector<8x4xf32>,
    return
  }
}

</mosaic_0001>

<llo_original>
// kernel: ensemble_forward.1
$region0: #{ensemble_forward.1}
  #allocation0 [shape = 'u32[]', space=smem, size = 0x4, offset = 0x4, fixed_abs, tag = 'smem constant byte address 0x4 - core index']
  #allocation1 [shape = 'u32[72,128]{1,0:T(1,128)}', space=vmem, size = 0x9000, scoped, tag = 'internal scratch']
  %s0 = inlined_call_operand.vmem [shape: f32[8,6], index: 0, kind: input, shape index: {}]
  %s1 = inlined_call_operand.hbm [shape: f32[6,640], index: 1, kind: input, shape index: {}]
  %s2 = inlined_call_operand.vmem [shape: f32[1,640], index: 2, kind: input, shape index: {}]
  %s3 = inlined_call_operand.vmem [shape: f32[1,640], index: 3, kind: input, shape index: {}]
  %s4 = inlined_call_operand.vmem [shape: f32[1,640], index: 4, kind: input, shape index: {}]
  %s5 = inlined_call_operand.vmem [shape: f32[5,128,128], index: 5, kind: input, shape index: {}]
  %s6 = inlined_call_operand.vmem [shape: f32[1,640], index: 6, kind: input, shape index: {}]
  %s7 = inlined_call_operand.vmem [shape: f32[5,128,4], index: 7, kind: input, shape index: {}]
  %s8 = inlined_call_operand.vmem [shape: f32[5,1,4], index: 8, kind: input, shape index: {}]
  %s9 = inlined_call_operand.vmem [shape: f32[5,8,4], index: 9, kind: output, shape index: {0}]
  %s10 = inlined_call_operand.vmem [shape: f32[8,4], index: 10, kind: output, shape index: {1}]
  %11 = xla_tuple %s9, %s10
  %s12 = sld [smem:[#allocation0]]
  $region58: #{ensemble_forward.1} parent=0
    _
  %s14 = ssub.s32 1, %s12
  %s15 = scalar_select 0, %s14, %s12
  $region1: #{ensemble_forward.1} parent=0
    #allocation2 [shape = 'u8[20480]{0}', space=vmem, size = 0x5000, scoped, tag = 'input window, operand 1, single buffered']
    #allocation3 [shape = 's32[1]{0}', space=sflag, size = 0x4, scoped, tag = 'scoped memory for ensemble_forward.1']
    %16 = vsyncpa [#allocation3], 0
    // Predicated region
    $region2: #{ensemble_forward.1} parent=1 // pred_check
      _
    $region3: #{ensemble_forward.1} parent=1 // pred_check_branch
      %18 = sbr.rel (0) target = $region5
    $region4: #{ensemble_forward.1} parent=1 // pred_region
      _
    $region5: #{ensemble_forward.1} parent=1 // pred_fallthru
      _
    // Predicated region
    $region6: #{ensemble_forward.1} parent=1 // pred_check
      _
    $region7: #{ensemble_forward.1} parent=1 // pred_check_branch
      %20 = sbr.rel (0) target = $region9
    $region8: #{ensemble_forward.1} parent=1 // pred_region
      %22 = vsyncadd [#allocation3], 0
      %s24 = sshll.u32 %s1, 4
      %s25 = int_to_ptr.hbm [resolvable:$true] %s24
      %s26 = sshll.u32 [#allocation2], 4
      %s27 = int_to_ptr.vmem [resolvable:$true] %s26
      %29 = dma.hbm_to_vmem [thread:$0]  %s25, 640, %s27, [#allocation3]
    $region9: #{ensemble_forward.1} parent=1 // pred_fallthru
      _
    // Predicated region
    $region10: #{ensemble_forward.1} parent=1 // pred_check
      _
    $region11: #{ensemble_forward.1} parent=1 // pred_check_branch
      %31 = sbr.rel (0) target = $region13
    $region12: #{ensemble_forward.1} parent=1 // pred_region
      _
    $region13: #{ensemble_forward.1} parent=1 // pred_fallthru
      _
    // Predicated region
    $region14: #{ensemble_forward.1} parent=1 // pred_check
      _
    $region15: #{ensemble_forward.1} parent=1 // pred_check_branch
      %33 = sbr.rel (0) target = $region17
    $region16: #{ensemble_forward.1} parent=1 // pred_region
      _
    $region17: #{ensemble_forward.1} parent=1 // pred_fallthru
      _
    // Predicated region
    $region18: #{ensemble_forward.1} parent=1 // pred_check
      _
    $region19: #{ensemble_forward.1} parent=1 // pred_check_branch
      %35 = sbr.rel (0) target = $region21
    $region20: #{ensemble_forward.1} parent=1 // pred_region
      _
    $region21: #{ensemble_forward.1} parent=1 // pred_fallthru
      _
    // Predicated region
    $region22: #{ensemble_forward.1} parent=1 // pred_check
      _
    $region23: #{ensemble_forward.1} parent=1 // pred_check_branch
      %37 = sbr.rel (0) target = $region25
    $region24: #{ensemble_forward.1} parent=1 // pred_region
      _
    $region25: #{ensemble_forward.1} parent=1 // pred_fallthru
      _
    // Predicated region
    $region26: #{ensemble_forward.1} parent=1 // pred_check
      _
    $region27: #{ensemble_forward.1} parent=1 // pred_check_branch
      %39 = sbr.rel (0) target = $region29
    $region28: #{ensemble_forward.1} parent=1 // pred_region
      _
    $region29: #{ensemble_forward.1} parent=1 // pred_fallthru
      _
    // Predicated region
    $region30: #{ensemble_forward.1} parent=1 // pred_check
      _
    $region31: #{ensemble_forward.1} parent=1 // pred_check_branch
      %41 = sbr.rel (0) target = $region33
    $region32: #{ensemble_forward.1} parent=1 // pred_region
      _
    $region33: #{ensemble_forward.1} parent=1 // pred_fallthru
      _
    // Predicated region
    $region34: #{ensemble_forward.1} parent=1 // pred_check
      _
    $region35: #{ensemble_forward.1} parent=1 // pred_check_branch
      %43 = sbr.rel (0) target = $region37
    $region36: #{ensemble_forward.1} parent=1 // pred_region
      _
    $region37: #{ensemble_forward.1} parent=1 // pred_fallthru
      _
    // Predicated region
    $region38: #{ensemble_forward.1} parent=1 // pred_check
      _
    $region39: #{ensemble_forward.1} parent=1 // pred_check_branch
      %45 = sbr.rel (0) target = $region41
    $region40: #{ensemble_forward.1} parent=1 // pred_region
      %47 = dma.done [#allocation3], 640
    $region41: #{ensemble_forward.1} parent=1 // pred_fallthru
      _
    %v48 = vld [vmem:[%s0] sm:$0xff]
    %v49 = vld [vmem:[#allocation2] sm:$0x3f]
    %v50 = vld [vmem:[#allocation2 + $0x8] sm:$0x3f]
    %v51 = vld [vmem:[#allocation2 + $0x10] sm:$0x3f]
    %v52 = vld [vmem:[#allocation2 + $0x18] sm:$0x3f]
    %v53 = vld [vmem:[#allocation2 + $0x20] sm:$0x3f]
    %v54 = vld [vmem:[%s2] sm:$0x1f]
    %v56 = vperm.slane %v54, 0
    %v57 = vperm.slane %v54, 1
    %v58 = vperm.slane %v54, 2
    %v59 = vperm.slane %v54, 3
    %v60 = vperm.slane %v54, 4
    %vm66 = vcmask 48128
    %v68 = vsel %vm66, %v48, 0
    %vm70 = vcmask 1045504
    %v72 = vsel %vm70, %v49, 0
    %v75 = vsel %vm70, %v50, 0
    %v78 = vsel %vm70, %v51, 0
    %v81 = vsel %vm70, %v52, 0
    %v84 = vsel %vm70, %v53, 0
    %86 = vmatpush.msra.mxu0 0.0
    %87 = vmatpush.msra.mxu0 0.0
    %88 = vmatpush.msra.mxu0 0.0
    %89 = vmatpush.msra.mxu0 0.0
    %90 = vmatpush.msra.mxu0 0.0
    %91 = vmatpush.msra.mxu0 0.0
    %92 = vmatpush.msra.mxu0 0.0
    %93 = vmatpush.msra.mxu0 0.0
    %94 = vmatpush.msra.mxu0 0.0
    %95 = vmatpush.msra.mxu0 0.0
    %96 = vmatpush.msra.mxu0 0.0
    %97 = vmatpush.msra.mxu0 0.0
    %98 = vmatpush.msra.mxu0 0.0
    %99 = vmatpush.msra.mxu0 0.0
    %100 = vmatpush.msra.mxu0 0.0
    %101 = vmatpush.msra.mxu0 %v72
    %102 = vmatmul.f32.gmra.mxu0 %v68
    %v103 = vpop.f32.mrf.mxu0
    %v104 = vadd.f32 %v56, %v103
    %105 = vdwg.mxu0
    %106 = vmatpush.msra.mxu0 0.0
    %107 = vmatpush.msra.mxu0 0.0
    %108 = vmatpush.msra.mxu0 0.0
    %109 = vmatpush.msra.mxu0 0.0
    %110 = vmatpush.msra.mxu0 0.0
    %111 = vmatpush.msra.mxu0 0.0
    %112 = vmatpush.msra.mxu0 0.0
    %113 = vmatpush.msra.mxu0 0.0
    %114 = vmatpush.msra.mxu0 0.0
    %115 = vmatpush.msra.mxu0 0.0
    %116 = vmatpush.msra.mxu0 0.0
    %117 = vmatpush.msra.mxu0 0.0
    %118 = vmatpush.msra.mxu0 0.0
    %119 = vmatpush.msra.mxu0 0.0
    %120 = vmatpush.msra.mxu0 0.0
    %121 = vmatpush.msra.mxu0 %v75
    %122 = vmatmul.f32.gmra.mxu0 %v68
    %v123 = vpop.f32.mrf.mxu0
    %v124 = vadd.f32 %v57, %v123
    %125 = vdwg.mxu0
    %126 = vmatpush.msra.mxu0 0.0
    %127 = vmatpush.msra.mxu0 0.0
    %128 = vmatpush.msra.mxu0 0.0
    %129 = vmatpush.msra.mxu0 0.0
    %130 = vmatpush.msra.mxu0 0.0
    %131 = vmatpush.msra.mxu0 0.0
    %132 = vmatpush.msra.mxu0 0.0
    %133 = vmatpush.msra.mxu0 0.0
    %134 = vmatpush.msra.mxu0 0.0
    %135 = vmatpush.msra.mxu0 0.0
    %136 = vmatpush.msra.mxu0 0.0
    %137 = vmatpush.msra.mxu0 0.0
    %138 = vmatpush.msra.mxu0 0.0
    %139 = vmatpush.msra.mxu0 0.0
    %140 = vmatpush.msra.mxu0 0.0
    %141 = vmatpush.msra.mxu0 %v78
    %142 = vmatmul.f32.gmra.mxu0 %v68
    %v143 = vpop.f32.mrf.mxu0
    %v144 = vadd.f32 %v58, %v143
    %145 = vdwg.mxu0
    %146 = vmatpush.msra.mxu0 0.0
    %147 = vmatpush.msra.mxu0 0.0
    %148 = vmatpush.msra.mxu0 0.0
    %149 = vmatpush.msra.mxu0 0.0
    %150 = vmatpush.msra.mxu0 0.0
    %151 = vmatpush.msra.mxu0 0.0
    %152 = vmatpush.msra.mxu0 0.0
    %153 = vmatpush.msra.mxu0 0.0
    %154 = vmatpush.msra.mxu0 0.0
    %155 = vmatpush.msra.mxu0 0.0
    %156 = vmatpush.msra.mxu0 0.0
    %157 = vmatpush.msra.mxu0 0.0
    %158 = vmatpush.msra.mxu0 0.0
    %159 = vmatpush.msra.mxu0 0.0
    %160 = vmatpush.msra.mxu0 0.0
    %161 = vmatpush.msra.mxu0 %v81
    %162 = vmatmul.f32.gmra.mxu0 %v68
    %v163 = vpop.f32.mrf.mxu0
    %v164 = vadd.f32 %v59, %v163
    %165 = vdwg.mxu0
    %166 = vmatpush.msra.mxu0 0.0
    %167 = vmatpush.msra.mxu0 0.0
    %168 = vmatpush.msra.mxu0 0.0
    %169 = vmatpush.msra.mxu0 0.0
    %170 = vmatpush.msra.mxu0 0.0
    %171 = vmatpush.msra.mxu0 0.0
    %172 = vmatpush.msra.mxu0 0.0
    %173 = vmatpush.msra.mxu0 0.0
    %174 = vmatpush.msra.mxu0 0.0
    %175 = vmatpush.msra.mxu0 0.0
    %176 = vmatpush.msra.mxu0 0.0
    %177 = vmatpush.msra.mxu0 0.0
    %178 = vmatpush.msra.mxu0 0.0
    %179 = vmatpush.msra.mxu0 0.0
    %180 = vmatpush.msra.mxu0 0.0
    %181 = vmatpush.msra.mxu0 %v84
    %182 = vmatmul.f32.gmra.mxu0 %v68
    %v183 = vpop.f32.mrf.mxu0
    %v184 = vadd.f32 %v60, %v183
    %185 = vdwg.mxu0
    %v186 = vrot.slane %v104, 4
    %v187 = vadd.f32 %v104, %v186
    %v188 = vrot.slane %v187, 2
    %v189 = vadd.f32 %v187, %v188
    %v190 = vrot.slane %v189, 1
    %v191 = vadd.f32 %v189, %v190
    %v192 = vrot.slane %v124, 4
    %v193 = vadd.f32 %v124, %v192
    %v194 = vrot.slane %v193, 2
    %v195 = vadd.f32 %v193, %v194
    %v196 = vrot.slane %v195, 1
    %v197 = vadd.f32 %v195, %v196
    %v198 = vrot.slane %v144, 4
    %v199 = vadd.f32 %v144, %v198
    %v200 = vrot.slane %v199, 2
    %v201 = vadd.f32 %v199, %v200
    %v202 = vrot.slane %v201, 1
    %v203 = vadd.f32 %v201, %v202
    %v204 = vrot.slane %v164, 4
    %v205 = vadd.f32 %v164, %v204
    %v206 = vrot.slane %v205, 2
    %v207 = vadd.f32 %v205, %v206
    %v208 = vrot.slane %v207, 1
    %v209 = vadd.f32 %v207, %v208
    %v210 = vrot.slane %v184, 4
    %v211 = vadd.f32 %v184, %v210
    %v212 = vrot.slane %v211, 2
    %v213 = vadd.f32 %v211, %v212
    %v214 = vrot.slane %v213, 1
    %v215 = vadd.f32 %v213, %v214
    %v216 = vrcp.pop 8.0
    %v217 = vmul.f32 8.0, %v216
    %v218 = vsub.f32 1.0, %v217
    %v219 = vmul.f32 %v216, %v218
    %v220 = vadd.f32 %v216, %v219
    %vm221 = vweird.f32 %v216
    %v222 = vsel %vm221, %v216, %v220
    %v223 = vmul.f32 %v191, %v222
    %v224 = vmul.f32 %v197, %v222
    %v225 = vmul.f32 %v203, %v222
    %v226 = vmul.f32 %v209, %v222
    %v227 = vmul.f32 %v215, %v222
    %v228 = vsub.f32 %v104, %v223
    %v229 = vsub.f32 %v124, %v224
    %v230 = vsub.f32 %v144, %v225
    %v231 = vsub.f32 %v164, %v226
    %v232 = vsub.f32 %v184, %v227
    %v233 = vmul.f32 %v228, %v228
    %v234 = vmul.f32 %v229, %v229
    %v235 = vmul.f32 %v230, %v230
    %v236 = vmul.f32 %v231, %v231
    %v237 = vmul.f32 %v232, %v232
    %v238 = vrot.slane %v233, 4
    %v239 = vadd.f32 %v233, %v238
    %v240 = vrot.slane %v239, 2
    %v241 = vadd.f32 %v239, %v240
    %v242 = vrot.slane %v241, 1
    %v243 = vadd.f32 %v241, %v242
    %v244 = vrot.slane %v234, 4
    %v245 = vadd.f32 %v234, %v244
    %v246 = vrot.slane %v245, 2
    %v247 = vadd.f32 %v245, %v246
    %v248 = vrot.slane %v247, 1
    %v249 = vadd.f32 %v247, %v248
    %v250 = vrot.slane %v235, 4
    %v251 = vadd.f32 %v235, %v250
    %v252 = vrot.slane %v251, 2
    %v253 = vadd.f32 %v251, %v252
    %v254 = vrot.slane %v253, 1
    %v255 = vadd.f32 %v253, %v254
    %v256 = vrot.slane %v236, 4
    %v257 = vadd.f32 %v236, %v256
    %v258 = vrot.slane %v257, 2
    %v259 = vadd.f32 %v257, %v258
    %v260 = vrot.slane %v259, 1
    %v261 = vadd.f32 %v259, %v260
    %v262 = vrot.slane %v237, 4
    %v263 = vadd.f32 %v237, %v262
    %v264 = vrot.slane %v263, 2
    %v265 = vadd.f32 %v263, %v264
    %v266 = vrot.slane %v265, 1
    %v267 = vadd.f32 %v265, %v266
    %v268 = vmul.f32 %v243, %v222
    %v269 = vmul.f32 %v249, %v222
    %v270 = vmul.f32 %v255, %v222
    %v271 = vmul.f32 %v261, %v222
    %v272 = vmul.f32 %v267, %v222
    %v273 = vadd.f32 %v268, 1e-05
    %v274 = vadd.f32 %v269, 1e-05
    %v275 = vadd.f32 %v270, 1e-05
    %v276 = vadd.f32 %v271, 1e-05
    %v277 = vadd.f32 %v272, 1e-05
    %v278 = vrsqrt.pop %v273
    %v279 = vmul.f32 %v278, %v273
    %v280 = vmul.f32 %v279, %v278
    %v281 = vmul.f32 0.5, %v280
    %v282 = vsub.f32 1.5, %v281
    %v283 = vmul.f32 %v278, %v282
    %vm284 = vweird.f32 %v273
    %vm285 = vweird.f32 %v278
    %vm286 = vmor %vm284, %vm285
    %v287 = vsel %vm286, %v278, %v283
    %v288 = vrsqrt.pop %v274
    %v289 = vmul.f32 %v288, %v274
    %v290 = vmul.f32 %v289, %v288
    %v291 = vmul.f32 0.5, %v290
    %v292 = vsub.f32 1.5, %v291
    %v293 = vmul.f32 %v288, %v292
    %vm294 = vweird.f32 %v274
    %vm295 = vweird.f32 %v288
    %vm296 = vmor %vm294, %vm295
    %v297 = vsel %vm296, %v288, %v293
    %v298 = vrsqrt.pop %v275
    %v299 = vmul.f32 %v298, %v275
    %v300 = vmul.f32 %v299, %v298
    %v301 = vmul.f32 0.5, %v300
    %v302 = vsub.f32 1.5, %v301
    %v303 = vmul.f32 %v298, %v302
    %vm304 = vweird.f32 %v275
    %vm305 = vweird.f32 %v298
    %vm306 = vmor %vm304, %vm305
    %v307 = vsel %vm306, %v298, %v303
    %v308 = vrsqrt.pop %v276
    %v309 = vmul.f32 %v308, %v276
    %v310 = vmul.f32 %v309, %v308
    %v311 = vmul.f32 0.5, %v310
    %v312 = vsub.f32 1.5, %v311
    %v313 = vmul.f32 %v308, %v312
    %vm314 = vweird.f32 %v276
    %vm315 = vweird.f32 %v308
    %vm316 = vmor %vm314, %vm315
    %v317 = vsel %vm316, %v308, %v313
    %v318 = vrsqrt.pop %v277
    %v319 = vmul.f32 %v318, %v277
    %v320 = vmul.f32 %v319, %v318
    %v321 = vmul.f32 0.5, %v320
    %v322 = vsub.f32 1.5, %v321
    %v323 = vmul.f32 %v318, %v322
    %vm324 = vweird.f32 %v277
    %vm325 = vweird.f32 %v318
    %vm326 = vmor %vm324, %vm325
    %v327 = vsel %vm326, %v318, %v323
    %v328 = vmul.f32 %v228, %v287
    %v329 = vmul.f32 %v229, %v297
    %v330 = vmul.f32 %v230, %v307
    %v331 = vmul.f32 %v231, %v317
    %v332 = vmul.f32 %v232, %v327
    %v333 = vld [vmem:[%s3] sm:$0x1f]
    %v335 = vperm.slane %v333, 0
    %v336 = vperm.slane %v333, 1
    %v337 = vperm.slane %v333, 2
    %v338 = vperm.slane %v333, 3
    %v339 = vperm.slane %v333, 4
    %v345 = vmul.f32 %v328, %v335
    %v346 = vmul.f32 %v329, %v336
    %v347 = vmul.f32 %v330, %v337
    %v348 = vmul.f32 %v331, %v338
    %v349 = vmul.f32 %v332, %v339
    %v350 = vld [vmem:[%s4] sm:$0x1f]
    %v352 = vperm.slane %v350, 0
    %v353 = vperm.slane %v350, 1
    %v354 = vperm.slane %v350, 2
    %v355 = vperm.slane %v350, 3
    %v356 = vperm.slane %v350, 4
    %v362 = vadd.f32 %v345, %v352
    %v363 = vadd.f32 %v346, %v353
    %v364 = vadd.f32 %v347, %v354
    %v365 = vadd.f32 %v348, %v355
    %v366 = vadd.f32 %v349, %v356
    %v367 = vmax.f32 %v362, 0.0
    %v368 = vmax.f32 %v363, 0.0
    %v369 = vmax.f32 %v364, 0.0
    %v370 = vmax.f32 %v365, 0.0
    %v371 = vmax.f32 %v366, 0.0
    %v372 = vld [vmem:[%s5] sm:$0xff]
    %v373 = vld [vmem:[%s5 + $0x8] sm:$0xff]
    %v374 = vld [vmem:[%s5 + $0x10] sm:$0xff]
    %v375 = vld [vmem:[%s5 + $0x18] sm:$0xff]
    %v376 = vld [vmem:[%s5 + $0x20] sm:$0xff]
    %v377 = vld [vmem:[%s5 + $0x28] sm:$0xff]
    %v378 = vld [vmem:[%s5 + $0x30] sm:$0xff]
    %v379 = vld [vmem:[%s5 + $0x38] sm:$0xff]
    %v380 = vld [vmem:[%s5 + $0x40] sm:$0xff]
    %v381 = vld [vmem:[%s5 + $0x48] sm:$0xff]
    %v382 = vld [vmem:[%s5 + $0x50] sm:$0xff]
    %v383 = vld [vmem:[%s5 + $0x58] sm:$0xff]
    %v384 = vld [vmem:[%s5 + $0x60] sm:$0xff]
    %v385 = vld [vmem:[%s5 + $0x68] sm:$0xff]
    %v386 = vld [vmem:[%s5 + $0x70] sm:$0xff]
    %v387 = vld [vmem:[%s5 + $0x78] sm:$0xff]
    %v388 = vld [vmem:[%s6] sm:$0x1]
    %v390 = vperm.slane %v388, 0
    %392 = vmatpush.msra.mxu0 %v387
    %393 = vmatpush.msra.mxu0 %v386
    %394 = vmatpush.msra.mxu0 %v385
    %395 = vmatpush.msra.mxu0 %v384
    %396 = vmatpush.msra.mxu0 %v383
    %397 = vmatpush.msra.mxu0 %v382
    %398 = vmatpush.msra.mxu0 %v381
    %399 = vmatpush.msra.mxu0 %v380
    %400 = vmatpush.msra.mxu0 %v379
    %401 = vmatpush.msra.mxu0 %v378
    %402 = vmatpush.msra.mxu0 %v377
    %403 = vmatpush.msra.mxu0 %v376
    %404 = vmatpush.msra.mxu0 %v375
    %405 = vmatpush.msra.mxu0 %v374
    %406 = vmatpush.msra.mxu0 %v373
    %407 = vmatpush.msra.mxu0 %v372
    %408 = vmatmul.f32.gmra.mxu0 %v367
    %v409 = vpop.f32.mrf.mxu0
    %v410 = vadd.f32 %v390, %v409
    %411 = vdwg.mxu0
    %v412 = vmax.f32 %v410, 0.0
    %v413 = vld [vmem:[%s7] sm:$0xff]
    %v414 = vld [vmem:[%s7 + $0x8] sm:$0xff]
    %v415 = vld [vmem:[%s7 + $0x10] sm:$0xff]
    %v416 = vld [vmem:[%s7 + $0x18] sm:$0xff]
    %v417 = vld [vmem:[%s7 + $0x20] sm:$0xff]
    %v418 = vld [vmem:[%s7 + $0x28] sm:$0xff]
    %v419 = vld [vmem:[%s7 + $0x30] sm:$0xff]
    %v420 = vld [vmem:[%s7 + $0x38] sm:$0xff]
    %v421 = vld [vmem:[%s7 + $0x40] sm:$0xff]
    %v422 = vld [vmem:[%s7 + $0x48] sm:$0xff]
    %v423 = vld [vmem:[%s7 + $0x50] sm:$0xff]
    %v424 = vld [vmem:[%s7 + $0x58] sm:$0xff]
    %v425 = vld [vmem:[%s7 + $0x60] sm:$0xff]
    %v426 = vld [vmem:[%s7 + $0x68] sm:$0xff]
    %v427 = vld [vmem:[%s7 + $0x70] sm:$0xff]
    %v428 = vld [vmem:[%s7 + $0x78] sm:$0xff]
    %v429 = vld [vmem:[%s8] sm:$0x1]
    %v431 = vperm.slane %v429, 0
    %433 = vmatpush.msra.mxu0 %v428
    %434 = vmatpush.msra.mxu0 %v427
    %435 = vmatpush.msra.mxu0 %v426
    %436 = vmatpush.msra.mxu0 %v425
    %437 = vmatpush.msra.mxu0 %v424
    %438 = vmatpush.msra.mxu0 %v423
    %439 = vmatpush.msra.mxu0 %v422
    %440 = vmatpush.msra.mxu0 %v421
    %441 = vmatpush.msra.mxu0 %v420
    %442 = vmatpush.msra.mxu0 %v419
    %443 = vmatpush.msra.mxu0 %v418
    %444 = vmatpush.msra.mxu0 %v417
    %445 = vmatpush.msra.mxu0 %v416
    %446 = vmatpush.msra.mxu0 %v415
    %447 = vmatpush.msra.mxu0 %v414
    %448 = vmatpush.msra.mxu0 %v413
    %449 = vmatmul.f32.gmra.mxu0 %v412
    %v450 = vpop.f32.mrf.mxu0
    %v451 = vadd.f32 %v431, %v450
    %452 = vdwg.mxu0
    %vm453 = vcmask 31744
    %454 = vst.msk [vmem:[%s9] sm:$0xff] %vm453, %v451
    %v455 = vadd.f32 %v451, 0.0
    %s456 = scalar_lea.vmem %s5, 128
    %v457 = vld [vmem:[%s456] sm:$0xff]
    %v458 = vld [vmem:[%s456 + $0x8] sm:$0xff]
    %v459 = vld [vmem:[%s456 + $0x10] sm:$0xff]
    %v460 = vld [vmem:[%s456 + $0x18] sm:$0xff]
    %v461 = vld [vmem:[%s456 + $0x20] sm:$0xff]
    %v462 = vld [vmem:[%s456 + $0x28] sm:$0xff]
    %v463 = vld [vmem:[%s456 + $0x30] sm:$0xff]
    %v464 = vld [vmem:[%s456 + $0x38] sm:$0xff]
    %v465 = vld [vmem:[%s456 + $0x40] sm:$0xff]
    %v466 = vld [vmem:[%s456 + $0x48] sm:$0xff]
    %v467 = vld [vmem:[%s456 + $0x50] sm:$0xff]
    %v468 = vld [vmem:[%s456 + $0x58] sm:$0xff]
    %v469 = vld [vmem:[%s456 + $0x60] sm:$0xff]
    %v470 = vld [vmem:[%s456 + $0x68] sm:$0xff]
    %v471 = vld [vmem:[%s456 + $0x70] sm:$0xff]
    %v472 = vld [vmem:[%s456 + $0x78] sm:$0xff]
    %v473 = vld [vmem:[%s6 + $0x1] sm:$0x1]
    %v475 = vperm.slane %v473, 0
    %477 = vmatpush.msra.mxu0 %v472
    %478 = vmatpush.msra.mxu0 %v471
    %479 = vmatpush.msra.mxu0 %v470
    %480 = vmatpush.msra.mxu0 %v469
    %481 = vmatpush.msra.mxu0 %v468
    %482 = vmatpush.msra.mxu0 %v467
    %483 = vmatpush.msra.mxu0 %v466
    %484 = vmatpush.msra.mxu0 %v465
    %485 = vmatpush.msra.mxu0 %v464
    %486 = vmatpush.msra.mxu0 %v463
    %487 = vmatpush.msra.mxu0 %v462
    %488 = vmatpush.msra.mxu0 %v461
    %489 = vmatpush.msra.mxu0 %v460
    %490 = vmatpush.msra.mxu0 %v459
    %491 = vmatpush.msra.mxu0 %v458
    %492 = vmatpush.msra.mxu0 %v457
    %493 = vmatmul.f32.gmra.mxu0 %v368
    %v494 = vpop.f32.mrf.mxu0
    %v495 = vadd.f32 %v475, %v494
    %496 = vdwg.mxu0
    %v497 = vmax.f32 %v495, 0.0
    %s498 = scalar_lea.vmem %s7, 128
    %v499 = vld [vmem:[%s498] sm:$0xff]
    %v500 = vld [vmem:[%s498 + $0x8] sm:$0xff]
    %v501 = vld [vmem:[%s498 + $0x10] sm:$0xff]
    %v502 = vld [vmem:[%s498 + $0x18] sm:$0xff]
    %v503 = vld [vmem:[%s498 + $0x20] sm:$0xff]
    %v504 = vld [vmem:[%s498 + $0x28] sm:$0xff]
    %v505 = vld [vmem:[%s498 + $0x30] sm:$0xff]
    %v506 = vld [vmem:[%s498 + $0x38] sm:$0xff]
    %v507 = vld [vmem:[%s498 + $0x40] sm:$0xff]
    %v508 = vld [vmem:[%s498 + $0x48] sm:$0xff]
    %v509 = vld [vmem:[%s498 + $0x50] sm:$0xff]
    %v510 = vld [vmem:[%s498 + $0x58] sm:$0xff]
    %v511 = vld [vmem:[%s498 + $0x60] sm:$0xff]
    %v512 = vld [vmem:[%s498 + $0x68] sm:$0xff]
    %v513 = vld [vmem:[%s498 + $0x70] sm:$0xff]
    %v514 = vld [vmem:[%s498 + $0x78] sm:$0xff]
    %s515 = scalar_lea.vmem %s8, 1
    %v516 = vld [vmem:[%s515] sm:$0x1]
    %v518 = vperm.slane %v516, 0
    %520 = vmatpush.msra.mxu0 %v514
    %521 = vmatpush.msra.mxu0 %v513
    %522 = vmatpush.msra.mxu0 %v512
    %523 = vmatpush.msra.mxu0 %v511
    %524 = vmatpush.msra.mxu0 %v510
    %525 = vmatpush.msra.mxu0 %v509
    %526 = vmatpush.msra.mxu0 %v508
    %527 = vmatpush.msra.mxu0 %v507
    %528 = vmatpush.msra.mxu0 %v506
    %529 = vmatpush.msra.mxu0 %v505
    %530 = vmatpush.msra.mxu0 %v504
    %531 = vmatpush.msra.mxu0 %v503
    %532 = vmatpush.msra.mxu0 %v502
    %533 = vmatpush.msra.mxu0 %v501
    %534 = vmatpush.msra.mxu0 %v500
    %535 = vmatpush.msra.mxu0 %v499
    %536 = vmatmul.f32.gmra.mxu0 %v497
    %v537 = vpop.f32.mrf.mxu0
    %v538 = vadd.f32 %v518, %v537
    %539 = vdwg.mxu0
    %s540 = scalar_lea.vmem %s9, 8
    %541 = vst.msk [vmem:[%s540] sm:$0xff] %vm453, %v538
    %v542 = vadd.f32 %v455, %v538
    %s543 = scalar_lea.vmem %s5, 256
    %v544 = vld [vmem:[%s543] sm:$0xff]
    %v545 = vld [vmem:[%s543 + $0x8] sm:$0xff]
    %v546 = vld [vmem:[%s543 + $0x10] sm:$0xff]
    %v547 = vld [vmem:[%s543 + $0x18] sm:$0xff]
    %v548 = vld [vmem:[%s543 + $0x20] sm:$0xff]
    %v549 = vld [vmem:[%s543 + $0x28] sm:$0xff]
    %v550 = vld [vmem:[%s543 + $0x30] sm:$0xff]
    %v551 = vld [vmem:[%s543 + $0x38] sm:$0xff]
    %v552 = vld [vmem:[%s543 + $0x40] sm:$0xff]
    %v553 = vld [vmem:[%s543 + $0x48] sm:$0xff]
    %v554 = vld [vmem:[%s543 + $0x50] sm:$0xff]
    %v555 = vld [vmem:[%s543 + $0x58] sm:$0xff]
    %v556 = vld [vmem:[%s543 + $0x60] sm:$0xff]
    %v557 = vld [vmem:[%s543 + $0x68] sm:$0xff]
    %v558 = vld [vmem:[%s543 + $0x70] sm:$0xff]
    %v559 = vld [vmem:[%s543 + $0x78] sm:$0xff]
    %v560 = vld [vmem:[%s6 + $0x2] sm:$0x1]
    %v562 = vperm.slane %v560, 0
    %564 = vmatpush.msra.mxu0 %v559
    %565 = vmatpush.msra.mxu0 %v558
    %566 = vmatpush.msra.mxu0 %v557
    %567 = vmatpush.msra.mxu0 %v556
    %568 = vmatpush.msra.mxu0 %v555
    %569 = vmatpush.msra.mxu0 %v554
    %570 = vmatpush.msra.mxu0 %v553
    %571 = vmatpush.msra.mxu0 %v552
    %572 = vmatpush.msra.mxu0 %v551
    %573 = vmatpush.msra.mxu0 %v550
    %574 = vmatpush.msra.mxu0 %v549
    %575 = vmatpush.msra.mxu0 %v548
    %576 = vmatpush.msra.mxu0 %v547
    %577 = vmatpush.msra.mxu0 %v546
    %578 = vmatpush.msra.mxu0 %v545
    %579 = vmatpush.msra.mxu0 %v544
    %580 = vmatmul.f32.gmra.mxu0 %v369
    %v581 = vpop.f32.mrf.mxu0
    %v582 = vadd.f32 %v562, %v581
    %583 = vdwg.mxu0
    %v584 = vmax.f32 %v582, 0.0
    %s585 = scalar_lea.vmem %s7, 256
    %v586 = vld [vmem:[%s585] sm:$0xff]
    %v587 = vld [vmem:[%s585 + $0x8] sm:$0xff]
    %v588 = vld [vmem:[%s585 + $0x10] sm:$0xff]
    %v589 = vld [vmem:[%s585 + $0x18] sm:$0xff]
    %v590 = vld [vmem:[%s585 + $0x20] sm:$0xff]
    %v591 = vld [vmem:[%s585 + $0x28] sm:$0xff]
    %v592 = vld [vmem:[%s585 + $0x30] sm:$0xff]
    %v593 = vld [vmem:[%s585 + $0x38] sm:$0xff]
    %v594 = vld [vmem:[%s585 + $0x40] sm:$0xff]
    %v595 = vld [vmem:[%s585 + $0x48] sm:$0xff]
    %v596 = vld [vmem:[%s585 + $0x50] sm:$0xff]
    %v597 = vld [vmem:[%s585 + $0x58] sm:$0xff]
    %v598 = vld [vmem:[%s585 + $0x60] sm:$0xff]
    %v599 = vld [vmem:[%s585 + $0x68] sm:$0xff]
    %v600 = vld [vmem:[%s585 + $0x70] sm:$0xff]
    %v601 = vld [vmem:[%s585 + $0x78] sm:$0xff]
    %s602 = scalar_lea.vmem %s8, 2
    %v603 = vld [vmem:[%s602] sm:$0x1]
    %v605 = vperm.slane %v603, 0
    %607 = vmatpush.msra.mxu0 %v601
    %608 = vmatpush.msra.mxu0 %v600
    %609 = vmatpush.msra.mxu0 %v599
    %610 = vmatpush.msra.mxu0 %v598
    %611 = vmatpush.msra.mxu0 %v597
    %612 = vmatpush.msra.mxu0 %v596
    %613 = vmatpush.msra.mxu0 %v595
    %614 = vmatpush.msra.mxu0 %v594
    %615 = vmatpush.msra.mxu0 %v593
    %616 = vmatpush.msra.mxu0 %v592
    %617 = vmatpush.msra.mxu0 %v591
    %618 = vmatpush.msra.mxu0 %v590
    %619 = vmatpush.msra.mxu0 %v589
    %620 = vmatpush.msra.mxu0 %v588
    %621 = vmatpush.msra.mxu0 %v587
    %622 = vmatpush.msra.mxu0 %v586
    %623 = vmatmul.f32.gmra.mxu0 %v584
    %v624 = vpop.f32.mrf.mxu0
    %v625 = vadd.f32 %v605, %v624
    %626 = vdwg.mxu0
    %s627 = scalar_lea.vmem %s9, 16
    %628 = vst.msk [vmem:[%s627] sm:$0xff] %vm453, %v625
    %v629 = vadd.f32 %v542, %v625
    %s630 = scalar_lea.vmem %s5, 384
    %v631 = vld [vmem:[%s630] sm:$0xff]
    %v632 = vld [vmem:[%s630 + $0x8] sm:$0xff]
    %v633 = vld [vmem:[%s630 + $0x10] sm:$0xff]
    %v634 = vld [vmem:[%s630 + $0x18] sm:$0xff]
    %v635 = vld [vmem:[%s630 + $0x20] sm:$0xff]
    %v636 = vld [vmem:[%s630 + $0x28] sm:$0xff]
    %v637 = vld [vmem:[%s630 + $0x30] sm:$0xff]
    %v638 = vld [vmem:[%s630 + $0x38] sm:$0xff]
    %v639 = vld [vmem:[%s630 + $0x40] sm:$0xff]
    %v640 = vld [vmem:[%s630 + $0x48] sm:$0xff]
    %v641 = vld [vmem:[%s630 + $0x50] sm:$0xff]
    %v642 = vld [vmem:[%s630 + $0x58] sm:$0xff]
    %v643 = vld [vmem:[%s630 + $0x60] sm:$0xff]
    %v644 = vld [vmem:[%s630 + $0x68] sm:$0xff]
    %v645 = vld [vmem:[%s630 + $0x70] sm:$0xff]
    %v646 = vld [vmem:[%s630 + $0x78] sm:$0xff]
    %v647 = vld [vmem:[%s6 + $0x3] sm:$0x1]
    %v649 = vperm.slane %v647, 0
    %651 = vmatpush.msra.mxu0 %v646
    %652 = vmatpush.msra.mxu0 %v645
    %653 = vmatpush.msra.mxu0 %v644
    %654 = vmatpush.msra.mxu0 %v643
    %655 = vmatpush.msra.mxu0 %v642
    %656 = vmatpush.msra.mxu0 %v641
    %657 = vmatpush.msra.mxu0 %v640
    %658 = vmatpush.msra.mxu0 %v639
    %659 = vmatpush.msra.mxu0 %v638
    %660 = vmatpush.msra.mxu0 %v637
    %661 = vmatpush.msra.mxu0 %v636
    %662 = vmatpush.msra.mxu0 %v635
    %663 = vmatpush.msra.mxu0 %v634
    %664 = vmatpush.msra.mxu0 %v633
    %665 = vmatpush.msra.mxu0 %v632
    %666 = vmatpush.msra.mxu0 %v631
    %667 = vmatmul.f32.gmra.mxu0 %v370
    %v668 = vpop.f32.mrf.mxu0
    %v669 = vadd.f32 %v649, %v668
    %670 = vdwg.mxu0
    %v671 = vmax.f32 %v669, 0.0
    %s672 = scalar_lea.vmem %s7, 384
    %v673 = vld [vmem:[%s672] sm:$0xff]
    %v674 = vld [vmem:[%s672 + $0x8] sm:$0xff]
    %v675 = vld [vmem:[%s672 + $0x10] sm:$0xff]
    %v676 = vld [vmem:[%s672 + $0x18] sm:$0xff]
    %v677 = vld [vmem:[%s672 + $0x20] sm:$0xff]
    %v678 = vld [vmem:[%s672 + $0x28] sm:$0xff]
    %v679 = vld [vmem:[%s672 + $0x30] sm:$0xff]
    %v680 = vld [vmem:[%s672 + $0x38] sm:$0xff]
    %v681 = vld [vmem:[%s672 + $0x40] sm:$0xff]
    %v682 = vld [vmem:[%s672 + $0x48] sm:$0xff]
    %v683 = vld [vmem:[%s672 + $0x50] sm:$0xff]
    %v684 = vld [vmem:[%s672 + $0x58] sm:$0xff]
    %v685 = vld [vmem:[%s672 + $0x60] sm:$0xff]
    %v686 = vld [vmem:[%s672 + $0x68] sm:$0xff]
    %v687 = vld [vmem:[%s672 + $0x70] sm:$0xff]
    %v688 = vld [vmem:[%s672 + $0x78] sm:$0xff]
    %s689 = scalar_lea.vmem %s8, 3
    %v690 = vld [vmem:[%s689] sm:$0x1]
    %v692 = vperm.slane %v690, 0
    %694 = vmatpush.msra.mxu0 %v688
    %695 = vmatpush.msra.mxu0 %v687
    %696 = vmatpush.msra.mxu0 %v686
    %697 = vmatpush.msra.mxu0 %v685
    %698 = vmatpush.msra.mxu0 %v684
    %699 = vmatpush.msra.mxu0 %v683
    %700 = vmatpush.msra.mxu0 %v682
    %701 = vmatpush.msra.mxu0 %v681
    %702 = vmatpush.msra.mxu0 %v680
    %703 = vmatpush.msra.mxu0 %v679
    %704 = vmatpush.msra.mxu0 %v678
    %705 = vmatpush.msra.mxu0 %v677
    %706 = vmatpush.msra.mxu0 %v676
    %707 = vmatpush.msra.mxu0 %v675
    %708 = vmatpush.msra.mxu0 %v674
    %709 = vmatpush.msra.mxu0 %v673
    %710 = vmatmul.f32.gmra.mxu0 %v671
    %v711 = vpop.f32.mrf.mxu0
    %v712 = vadd.f32 %v692, %v711
    %713 = vdwg.mxu0
    %s714 = scalar_lea.vmem %s9, 24
    %715 = vst.msk [vmem:[%s714] sm:$0xff] %vm453, %v712
    %v716 = vadd.f32 %v629, %v712
    %s717 = scalar_lea.vmem %s5, 512
    %v718 = vld [vmem:[%s717] sm:$0xff]
    %v719 = vld [vmem:[%s717 + $0x8] sm:$0xff]
    %v720 = vld [vmem:[%s717 + $0x10] sm:$0xff]
    %v721 = vld [vmem:[%s717 + $0x18] sm:$0xff]
    %v722 = vld [vmem:[%s717 + $0x20] sm:$0xff]
    %v723 = vld [vmem:[%s717 + $0x28] sm:$0xff]
    %v724 = vld [vmem:[%s717 + $0x30] sm:$0xff]
    %v725 = vld [vmem:[%s717 + $0x38] sm:$0xff]
    %v726 = vld [vmem:[%s717 + $0x40] sm:$0xff]
    %v727 = vld [vmem:[%s717 + $0x48] sm:$0xff]
    %v728 = vld [vmem:[%s717 + $0x50] sm:$0xff]
    %v729 = vld [vmem:[%s717 + $0x58] sm:$0xff]
    %v730 = vld [vmem:[%s717 + $0x60] sm:$0xff]
    %v731 = vld [vmem:[%s717 + $0x68] sm:$0xff]
    %v732 = vld [vmem:[%s717 + $0x70] sm:$0xff]
    %v733 = vld [vmem:[%s717 + $0x78] sm:$0xff]
    %v734 = vld [vmem:[%s6 + $0x4] sm:$0x1]
    %v736 = vperm.slane %v734, 0
    %738 = vmatpush.msra.mxu0 %v733
    %739 = vmatpush.msra.mxu0 %v732
    %740 = vmatpush.msra.mxu0 %v731
    %741 = vmatpush.msra.mxu0 %v730
    %742 = vmatpush.msra.mxu0 %v729
    %743 = vmatpush.msra.mxu0 %v728
    %744 = vmatpush.msra.mxu0 %v727
    %745 = vmatpush.msra.mxu0 %v726
    %746 = vmatpush.msra.mxu0 %v725
    %747 = vmatpush.msra.mxu0 %v724
    %748 = vmatpush.msra.mxu0 %v723
    %749 = vmatpush.msra.mxu0 %v722
    %750 = vmatpush.msra.mxu0 %v721
    %751 = vmatpush.msra.mxu0 %v720
    %752 = vmatpush.msra.mxu0 %v719
    %753 = vmatpush.msra.mxu0 %v718
    %754 = vmatmul.f32.gmra.mxu0 %v371
    %v755 = vpop.f32.mrf.mxu0
    %v756 = vadd.f32 %v736, %v755
    %757 = vdwg.mxu0
    %v758 = vmax.f32 %v756, 0.0
    %s759 = scalar_lea.vmem %s7, 512
    %v760 = vld [vmem:[%s759] sm:$0xff]
    %v761 = vld [vmem:[%s759 + $0x8] sm:$0xff]
    %v762 = vld [vmem:[%s759 + $0x10] sm:$0xff]
    %v763 = vld [vmem:[%s759 + $0x18] sm:$0xff]
    %v764 = vld [vmem:[%s759 + $0x20] sm:$0xff]
    %v765 = vld [vmem:[%s759 + $0x28] sm:$0xff]
    %v766 = vld [vmem:[%s759 + $0x30] sm:$0xff]
    %v767 = vld [vmem:[%s759 + $0x38] sm:$0xff]
    %v768 = vld [vmem:[%s759 + $0x40] sm:$0xff]
    %v769 = vld [vmem:[%s759 + $0x48] sm:$0xff]
    %v770 = vld [vmem:[%s759 + $0x50] sm:$0xff]
    %v771 = vld [vmem:[%s759 + $0x58] sm:$0xff]
    %v772 = vld [vmem:[%s759 + $0x60] sm:$0xff]
    %v773 = vld [vmem:[%s759 + $0x68] sm:$0xff]
    %v774 = vld [vmem:[%s759 + $0x70] sm:$0xff]
    %v775 = vld [vmem:[%s759 + $0x78] sm:$0xff]
    %s776 = scalar_lea.vmem %s8, 4
    %v777 = vld [vmem:[%s776] sm:$0x1]
    %v779 = vperm.slane %v777, 0
    %781 = vmatpush.msra.mxu0 %v775
    %782 = vmatpush.msra.mxu0 %v774
    %783 = vmatpush.msra.mxu0 %v773
    %784 = vmatpush.msra.mxu0 %v772
    %785 = vmatpush.msra.mxu0 %v771
    %786 = vmatpush.msra.mxu0 %v770
    %787 = vmatpush.msra.mxu0 %v769
    %788 = vmatpush.msra.mxu0 %v768
    %789 = vmatpush.msra.mxu0 %v767
    %790 = vmatpush.msra.mxu0 %v766
    %791 = vmatpush.msra.mxu0 %v765
    %792 = vmatpush.msra.mxu0 %v764
    %793 = vmatpush.msra.mxu0 %v763
    %794 = vmatpush.msra.mxu0 %v762
    %795 = vmatpush.msra.mxu0 %v761
    %796 = vmatpush.msra.mxu0 %v760
    %797 = vmatmul.f32.gmra.mxu0 %v758
    %v798 = vpop.f32.mrf.mxu0
    %v799 = vadd.f32 %v779, %v798
    %800 = vdwg.mxu0
    %s801 = scalar_lea.vmem %s9, 32
    %802 = vst.msk [vmem:[%s801] sm:$0xff] %vm453, %v799
    %v803 = vadd.f32 %v716, %v799
    %v804 = vmul.f32 %v803, 0.2
    %805 = vst.msk [vmem:[%s10] sm:$0xff] %vm453, %v804
    // Predicated region
    $region42: #{ensemble_forward.1} parent=1 // pred_check
      _
    $region43: #{ensemble_forward.1} parent=1 // pred_check_branch
      %807 = sbr.rel (0) target = $region45
    $region44: #{ensemble_forward.1} parent=1 // pred_region
      _
    $region45: #{ensemble_forward.1} parent=1 // pred_fallthru
      _
    // Predicated region
    $region46: #{ensemble_forward.1} parent=1 // pred_check
      _
    $region47: #{ensemble_forward.1} parent=1 // pred_check_branch
      %809 = sbr.rel (0) target = $region49
    $region48: #{ensemble_forward.1} parent=1 // pred_region
      _
    $region49: #{ensemble_forward.1} parent=1 // pred_fallthru
      _
    // Predicated region
    $region50: #{ensemble_forward.1} parent=1 // pred_check
      _
    $region51: #{ensemble_forward.1} parent=1 // pred_check_branch
      %811 = sbr.rel (0) target = $region53
    $region52: #{ensemble_forward.1} parent=1 // pred_region
      _
    $region53: #{ensemble_forward.1} parent=1 // pred_fallthru
      _
    // Predicated region
    $region54: #{ensemble_forward.1} parent=1 // pred_check
      _
    $region55: #{ensemble_forward.1} parent=1 // pred_check_branch
      %813 = sbr.rel (0) target = $region57
    $region56: #{ensemble_forward.1} parent=1 // pred_region
      _
    $region57: #{ensemble_forward.1} parent=1 // pred_fallthru
      _
    %814 = vsyncpa [#allocation3], 1

</llo_original>
